<compile_context>
chip_gen: v7x
topology: tpu7x:2x2x1
jax: 0.10.0
libtpu: 0.0.40
codegen_flags: <defaults>
</compile_context>

<pallas_src>
import functools
import numpy as np

import jax
import jax.numpy as jnp
from jax.experimental import pallas as pl
from jax.experimental.pallas import tpu as pltpu


def _round_up(x, m):
    return ((x + m - 1) // m) * m


def _physical_vmem_bytes():
    try:
        return int(pltpu.get_tpu_info().vmem_capacity_bytes)
    except Exception:
        return 64 * 1024 * 1024      # v7x per-TC floor; safe lower bound elsewhere


# ---------------------------------------------------------------------------
# Pallas kernel: one gated-RGCN layer.
# Grid = (node tiles ["parallel"], edge tiles ["arbitrary"]); edges are
# pre-sorted by relation so every edge tile touches exactly one relation.
# ---------------------------------------------------------------------------
def _rgcn_layer_kernel(gate_col, d_pad,
                       tile_rel_ref,   # (T,) int32 SMEM (scalar prefetch; drives index_maps)
                       dst_ref,        # (1, tE)      int32  destination node ids
                       hsrc_ref,       # (tE, Dp)     bf16   gathered h[src]
                       w_ref,          # (1, Dp, Dw)  bf16   W[rel], gate_w folded in col `gate_col`
                       norm_ref,       # (tE, 1)      f32    edge norm * padding validity
                       out_ref):       # (tN, Dp)     f32    resident output / accumulator
    n = pl.program_id(0)               # node tile  (parallel)
    t = pl.program_id(1)               # edge tile  (reduction)
    tile_n, _ = out_ref.shape
    tile_e = hsrc_ref.shape[0]

    @pl.when(t == 0)
    def _():
        out_ref[...] = jnp.zeros_like(out_ref)

    # msg_full[:, :d] = h_src @ W[rel] ; msg_full[:, gate_col] = h_src . gate_w[rel]
    # (single MXU pass, bf16 operands, f32 accumulation)
    msg_full = jnp.dot(hsrc_ref[...], w_ref[0],
                       preferred_element_type=jnp.float32)            # (tE, Dw)

    gate = jax.nn.sigmoid(msg_full[:, gate_col:gate_col + 1])         # (tE, 1)
    # one combined per-edge scale (norm already carries edge-padding validity)
    msg = msg_full[:, :d_pad] * (gate * norm_ref[...])                # (tE, Dp)

    # scatter-add over destination nodes: build the (tN, tE) one-hot on-chip
    row_ids = jax.lax.broadcasted_iota(jnp.int32, (tile_n, tile_e), 0) + n * tile_n
    onehot = (row_ids == dst_ref[...]).astype(jnp.bfloat16)           # (tN, tE)

    out_ref[...] += jnp.dot(onehot, msg.astype(jnp.bfloat16),
                            preferred_element_type=jnp.float32)       # (tN, Dp)

    @pl.when(t == pl.num_programs(1) - 1)
    def _():
        # apply_func: ReLU on the aggregated node features, in place.
        out_ref[...] = jnp.maximum(out_ref[...], 0.0)


def rgcn_layer_pallas(h, src_sorted, dst_sorted, norm_sorted, tile_rel,
                      weight, gate_weight, *, tile_e=256, tile_n=256):
    """One gated RGCN layer: h_new = relu( scatter_add( gated messages ) )."""
    n_nodes, d = h.shape
    num_rels = weight.shape[0]
    num_edge_tiles = int(tile_rel.shape[0])
    e_pad = num_edge_tiles * tile_e

    d_pad = _round_up(d, 128)              # node-feature / message width (lane-dense)
    d_w = _round_up(d + 1, 128)            # W output width (guaranteed spare gate column)
    tile_n = min(tile_n, _round_up(n_nodes, 8))
    n_pad = _round_up(n_nodes, tile_n)
    num_node_tiles = n_pad // tile_n

    # --- glue (plain JAX): pad feature dim, gather source rows, fold gate ---
    h_p = jnp.pad(h.astype(jnp.float32), ((0, 0), (0, d_pad - d)))
    h_src = jnp.take(h_p, src_sorted, axis=0).astype(jnp.bfloat16)      # (Ep, Dp)

    w_p = jnp.zeros((num_rels, d_pad, d_w), jnp.float32)
    w_p = w_p.at[:, :d, :d].set(weight)
    w_p = w_p.at[:, :d, d].set(gate_weight[:, :, 0])                    # fused gate column
    w_p = w_p.astype(jnp.bfloat16)                                      # (R, Dp, Dw)

    dst2 = dst_sorted.reshape(1, e_pad).astype(jnp.int32)               # (1, Ep)

    grid_spec = pltpu.PrefetchScalarGridSpec(
        num_scalar_prefetch=1,
        grid=(num_node_tiles, num_edge_tiles),
        in_specs=[
            pl.BlockSpec((1, tile_e), lambda n, t, rel: (0, t)),              # dst ids
            pl.BlockSpec((tile_e, d_pad), lambda n, t, rel: (t, 0)),          # h_src
            pl.BlockSpec((1, d_pad, d_w), lambda n, t, rel: (rel[t], 0, 0)),  # W[rel]+gate
            pl.BlockSpec((tile_e, 1), lambda n, t, rel: (t, 0)),              # norm*valid
        ],
        out_specs=pl.BlockSpec((tile_n, d_pad), lambda n, t, rel: (n, 0)),
    )

    # VMEM budget from the actual block shapes (double-buffered inputs +
    # resident f32 output) with pipeline headroom, capped by the chip.
    block_bytes = (
        2 * (8 * tile_e * 4)            # dst   (sublane-padded int32)
        + 2 * (tile_e * d_pad * 2)      # h_src (bf16)
        + 2 * (d_pad * d_w * 2)         # W     (bf16)
        + 2 * (tile_e * 128 * 4)        # norm  (lane-padded f32)
        + 2 * (tile_n * d_pad * 4)      # resident output block (f32)
    )
    vmem_limit = max(2 * block_bytes + (4 << 20), 32 << 20)
    vmem_limit = min(vmem_limit, int(0.8 * _physical_vmem_bytes()))

    out = pl.pallas_call(
        functools.partial(_rgcn_layer_kernel, d, d_pad),
        out_shape=jax.ShapeDtypeStruct((n_pad, d_pad), jnp.float32),
        grid_spec=grid_spec,
        compiler_params=pltpu.CompilerParams(
            dimension_semantics=("parallel", "arbitrary"),
            vmem_limit_bytes=vmem_limit),
    )(tile_rel, dst2, h_src, w_p, norm_sorted)

    return out[:n_nodes, :d].astype(h.dtype)


# ---------------------------------------------------------------------------
# Host-side graph preprocessing: sort edges by relation, pad each relation
# group to a multiple of the edge tile, record per-tile relation ids.
# ---------------------------------------------------------------------------
def build_edge_plan(rel_type, num_rels, tile_e=256):
    rel = np.asarray(jax.device_get(rel_type))
    perm_parts, valid_parts, tile_rel = [], [], []
    for r in range(num_rels):
        idx = np.nonzero(rel == r)[0]
        n = int(idx.shape[0])
        if n == 0:
            continue
        n_tiles = -(-n // tile_e)
        n_padded = n_tiles * tile_e
        perm_parts.append(np.concatenate(
            [idx, np.zeros(n_padded - n, dtype=idx.dtype)]))
        valid_parts.append(np.concatenate(
            [np.ones(n, np.float32), np.zeros(n_padded - n, np.float32)]))
        tile_rel.extend([r] * n_tiles)
    if not perm_parts:                                   # zero-edge graph
        return (np.zeros((0,), np.int32),
                np.zeros((0, 1), np.float32),
                np.zeros((0,), np.int32))
    perm = np.concatenate(perm_parts).astype(np.int32)
    valid = np.concatenate(valid_parts).astype(np.float32)[:, None]
    tile_rel = np.asarray(tile_rel, dtype=np.int32)
    return perm, valid, tile_rel


# ---------------------------------------------------------------------------
# Parameter init (deterministic) — mirrors nn.init.xavier_uniform_ semantics.
# ---------------------------------------------------------------------------
def _xavier_uniform(key, shape, gain):
    receptive = 1
    for s in shape[2:]:
        receptive *= s
    fan_in = shape[1] * receptive
    fan_out = shape[0] * receptive
    bound = gain * (6.0 / (fan_in + fan_out)) ** 0.5
    return jax.random.uniform(key, shape, jnp.float32, -bound, bound)


def init_rgcn_params(key, h_dim, num_rels, num_hidden_layers):
    params = []
    relu_gain = 2.0 ** 0.5        # calculate_gain('relu')
    sigmoid_gain = 1.0            # calculate_gain('sigmoid')
    for _ in range(num_hidden_layers):
        k1, k2, key = jax.random.split(key, 3)
        w = _xavier_uniform(k1, (num_rels, h_dim, h_dim), relu_gain)
        gw = _xavier_uniform(k2, (num_rels, h_dim, 1), sigmoid_gain)
        params.append((w, gw))
    return params


def rgcn_model_forward(params, h, src, dst, rel_type, norm,
                       graph_node_counts, *, tile_e=256, tile_n=256):
    """Full RGCNModel forward: run layers, then 'unbatch' node features."""
    num_rels = params[0][0].shape[0]

    perm_np, valid_np, tile_rel_np = build_edge_plan(rel_type, num_rels, tile_e)

    if tile_rel_np.size == 0:
        # no edges: every aggregated message is 0, so each layer yields relu(0)=0
        h = jnp.zeros_like(h)
    else:
        perm = jnp.asarray(perm_np)
        valid = jnp.asarray(valid_np)
        tile_rel = jnp.asarray(tile_rel_np)
        src_sorted = jnp.take(src, perm)
        dst_sorted = jnp.take(dst, perm)
        norm_sorted = (jnp.take(norm, perm, axis=0) * valid).astype(jnp.float32)
        for (w, gw) in params:
            h = rgcn_layer_pallas(h, src_sorted, dst_sorted, norm_sorted,
                                  tile_rel, w, gw, tile_e=tile_e, tile_n=tile_n)

    # dgl.unbatch: split the batched graph's node features per sub-graph.
    outs, off = [], 0
    for cnt in graph_node_counts:
        outs.append(h[off:off + cnt])
        off += cnt
    return outs


# ---------------------------------------------------------------------------
# Pure-JAX f32 reference of one gated layer (for a tolerance check).
# ---------------------------------------------------------------------------
def _rgcn_layer_ref(h, src, dst, rel_type, norm, weight, gate_weight):
    h_src = h[src]                                                    # (E, D)
    w_e = weight[rel_type]                                            # (E, D, D)
    gw_e = gate_weight[rel_type]                                      # (E, D, 1)
    msg = jnp.einsum('ed,edf->ef', h_src, w_e) * norm
    gate = jax.nn.sigmoid(jnp.einsum('ed,edf->ef', h_src, gw_e))      # (E, 1)
    msg = msg * gate
    agg = jnp.zeros_like(h).at[dst].add(msg)
    return jax.nn.relu(agg)


# ---------------------------------------------------------------------------
# Demo
# ---------------------------------------------------------------------------
if __name__ == "__main__":
    key = jax.random.PRNGKey(0)

    h_dim = 32
    num_rels = 4
    num_hidden_layers = 1
    graph_node_counts = [8, 8]           # two sub-graphs of 8 nodes each
    n_nodes = sum(graph_node_counts)     # 16
    n_edges = 32

    k_h, k_src, k_dst, k_rel, k_p = jax.random.split(key, 5)

    # node features
    h = jax.random.normal(k_h, (n_nodes, h_dim), jnp.float32)

    # edges: keep each edge inside its own sub-graph (like a batched DGL graph)
    src0 = jax.random.randint(k_src, (n_edges // 2,), 0, graph_node_counts[0])
    dst0 = jax.random.randint(k_dst, (n_edges // 2,), 0, graph_node_counts[0])
    src = jnp.concatenate([src0, src0 + graph_node_counts[0]]).astype(jnp.int32)
    dst = jnp.concatenate([dst0, dst0 + graph_node_counts[0]]).astype(jnp.int32)
    rel_type = jax.random.randint(k_rel, (n_edges,), 0, num_rels).astype(jnp.int32)

    # standard RGCN edge norm: 1 / in_degree(dst)
    in_deg = jnp.zeros((n_nodes,), jnp.float32).at[dst].add(1.0)
    norm = (1.0 / jnp.maximum(in_deg[dst], 1.0))[:, None]             # (E, 1)

    params = init_rgcn_params(k_p, h_dim, num_rels, num_hidden_layers)

    # tile_n=8 so the small demo also exercises the parallel node-tile axis.
    outs = rgcn_model_forward(params, h, src, dst, rel_type, norm,
                              graph_node_counts, tile_e=256, tile_n=8)
    outs = [jax.block_until_ready(o) for o in outs]

    assert len(outs) == len(graph_node_counts)
    assert all(o.shape == (c, h_dim) for o, c in zip(outs, graph_node_counts))
    assert all(bool(jnp.all(jnp.isfinite(o))) for o in outs)

    # correctness vs f32 reference (bf16 MXU operands -> ~2^-8 relative error)
    h_ref = h
    for (w, gw) in params:
        h_ref = _rgcn_layer_ref(h_ref, src, dst, rel_type, norm, w, gw)
    got = jnp.concatenate(outs, axis=0)
    np.testing.assert_allclose(np.asarray(got), np.asarray(h_ref),
                               rtol=5e-2, atol=5e-2)

    print("KERNEL_OK")
</pallas_src>

<mosaic_0001>
module attributes {stable_mosaic.version = 11 : i64} {
  func.func @_rgcn_layer_kernel(%arg0: i32, %arg1: i32, %arg2: memref<4xi32, #tpu.memory_space<smem>>, %arg3: memref<1x256xi32, #tpu.memory_space<vmem>>, %arg4: memref<256x128xbf16, #tpu.memory_space<vmem>>, %arg5: memref<1x128x128xbf16, #tpu.memory_space<vmem>>, %arg6: memref<256x1xf32, #tpu.memory_space<vmem>>, %arg7: memref<8x128xf32, #tpu.memory_space<vmem>>) attributes {dimension_semantics = [#tpu.dimension_semantics<parallel>, #tpu.dimension_semantics<arbitrary>], iteration_bounds = array<i64: 2, 4>, scalar_prefetch = 1 : i64, scratch_operands = 0 : i64, tpu.core_type = #tpu.core_type<tc>, window_params = [{transform_indices = @transform_0, window_bounds = array<i64: 1, 256>}, {transform_indices = @transform_1, window_bounds = array<i64: 256, 128>}, {transform_indices = @transform_2, window_bounds = array<i64: 1, 128, 128>}, {transform_indices = @transform_3, window_bounds = array<i64: 256, 1>}, {transform_indices = @transform_4, window_bounds = array<i64: 8, 128>}]} {
    %c0_i32 = arith.constant 0 : i32
    %0 = arith.cmpi eq, %arg1, %c0_i32 : i32
    %1 = arith.extui %0 : i1 to i32
    %c0_i32_0 = arith.constant 0 : i32
    %2 = arith.cmpi ne, %1, %c0_i32_0 : i32
    scf.if %2 {
      %cst_16 = arith.constant 0.000000e+00 : f32
      %35 = vector.broadcast %cst_16 : f32 to vector<8x128xf32>
      %c0_17 = arith.constant 0 : index
      %c0_18 = arith.constant 0 : index
      %36 = vector.load %arg7[%c0_17, %c0_18] : memref<8x128xf32, #tpu.memory_space<vmem>>, vector<8x128xf32>
      tpu.vector_store %arg7[%c0_17, %c0_18], %35 {strides = array<i32>} : memref<8x128xf32, #tpu.memory_space<vmem>>, vector<8x128xf32>,
    } else {
    }
    %c0 = arith.constant 0 : index
    %c0_1 = arith.constant 0 : index
    %3 = vector.load %arg4[%c0, %c0_1] : memref<256x128xbf16, #tpu.memory_space<vmem>>, vector<256x128xbf16>
    %c0_2 = arith.constant 0 : index
    %c0_3 = arith.constant 0 : index
    %c0_4 = arith.constant 0 : index
    %4 = vector.load %arg5[%c0_2, %c0_3, %c0_4] : memref<1x128x128xbf16, #tpu.memory_space<vmem>>, vector<1x128x128xbf16>
    %5 = vector.shape_cast %4 : vector<1x128x128xbf16> to vector<128x128xbf16>
    %cst = arith.constant dense<0.000000e+00> : vector<256x128xf32>
    %6 = tpu.matmul %3, %5, %cst {dimension_numbers = #tpu.dot_dimension_numbers<[1], [0], [0], [1], [0, 0, 1, 1], [], []>} : vector<256x128xbf16>, vector<128x128xbf16>, vector<256x128xf32> -> vector<256x128xf32>
    %7 = vector.extract_strided_slice %6 {offsets = [0, 32], sizes = [256, 1], strides = [1, 1]} : vector<256x128xf32> to vector<256x1xf32>
    %8 = arith.negf %7 : vector<256x1xf32>
    %9 = math.exp %8 : vector<256x1xf32>
    %cst_5 = arith.constant 1.000000e+00 : f32
    %10 = vector.broadcast %cst_5 : f32 to vector<256x1xf32>
    %11 = arith.addf %10, %9 : vector<256x1xf32>
    %12 = arith.divf %10, %11 : vector<256x1xf32>
    %c0_6 = arith.constant 0 : index
    %c0_7 = arith.constant 0 : index
    %13 = vector.load %arg6[%c0_6, %c0_7] : memref<256x1xf32, #tpu.memory_space<vmem>>, vector<256x1xf32>
    %14 = arith.mulf %12, %13 : vector<256x1xf32>
    %15 = vector.broadcast %14 : vector<256x1xf32> to vector<256x128xf32>
    %16 = arith.mulf %6, %15 : vector<256x128xf32>
    %17 = tpu.iota {dimensions = array<i32: 0>} : vector<8x256xi32>
    %c8_i32 = arith.constant 8 : i32
    %18 = arith.muli %arg0, %c8_i32 : i32
    %19 = vector.broadcast %18 : i32 to vector<8x256xi32>
    %20 = arith.addi %17, %19 : vector<8x256xi32>
    %c0_8 = arith.constant 0 : index
    %c0_9 = arith.constant 0 : index
    %21 = vector.load %arg3[%c0_8, %c0_9] : memref<1x256xi32, #tpu.memory_space<vmem>>, vector<1x256xi32>
    %22 = vector.broadcast %21 : vector<1x256xi32> to vector<8x256xi32>
    %23 = arith.cmpi eq, %20, %22 : vector<8x256xi32>
    %24 = arith.extui %23 : vector<8x256xi1> to vector<8x256xi32>
    %25 = arith.sitofp %24 : vector<8x256xi32> to vector<8x256xf32>
    %26 = arith.truncf %25 : vector<8x256xf32> to vector<8x256xbf16>
    %c0_10 = arith.constant 0 : index
    %c0_11 = arith.constant 0 : index
    %27 = vector.load %arg7[%c0_10, %c0_11] : memref<8x128xf32, #tpu.memory_space<vmem>>, vector<8x128xf32>
    %28 = arith.truncf %16 : vector<256x128xf32> to vector<256x128xbf16>
    %cst_12 = arith.constant dense<0.000000e+00> : vector<8x128xf32>
    %29 = tpu.matmul %26, %28, %cst_12 {dimension_numbers = #tpu.dot_dimension_numbers<[1], [0], [0], [1], [0, 0, 1, 1], [], []>} : vector<8x256xbf16>, vector<256x128xbf16>, vector<8x128xf32> -> vector<8x128xf32>
    %30 = arith.addf %27, %29 : vector<8x128xf32>
    %c0_13 = arith.constant 0 : index
    %c0_14 = arith.constant 0 : index
    %31 = vector.load %arg7[%c0_13, %c0_14] : memref<8x128xf32, #tpu.memory_space<vmem>>, vector<8x128xf32>
    tpu.vector_store %arg7[%c0_13, %c0_14], %30 {strides = array<i32>} : memref<8x128xf32, #tpu.memory_space<vmem>>, vector<8x128xf32>,
    %c3_i32 = arith.constant 3 : i32
    %32 = arith.cmpi eq, %arg1, %c3_i32 : i32
    %33 = arith.extui %32 : i1 to i32
    %c0_i32_15 = arith.constant 0 : i32
    %34 = arith.cmpi ne, %33, %c0_i32_15 : i32
    scf.if %34 {
      %c0_16 = arith.constant 0 : index
      %c0_17 = arith.constant 0 : index
      %35 = vector.load %arg7[%c0_16, %c0_17] : memref<8x128xf32, #tpu.memory_space<vmem>>, vector<8x128xf32>
      %cst_18 = arith.constant 0.000000e+00 : f32
      %36 = vector.broadcast %cst_18 : f32 to vector<8x128xf32>
      %37 = arith.maximumf %35, %36 : vector<8x128xf32>
      %c0_19 = arith.constant 0 : index
      %c0_20 = arith.constant 0 : index
      %38 = vector.load %arg7[%c0_19, %c0_20] : memref<8x128xf32, #tpu.memory_space<vmem>>, vector<8x128xf32>
      tpu.vector_store %arg7[%c0_19, %c0_20], %37 {strides = array<i32>} : memref<8x128xf32, #tpu.memory_space<vmem>>, vector<8x128xf32>,
    } else {
    }
    return
  }
  func.func @transform_0(%arg0: i32, %arg1: i32, %arg2: memref<4xi32, #tpu.memory_space<smem>>) -> (i32, i32) {
    %c0_i32 = arith.constant 0 : i32
    %c0_i32_0 = arith.constant 0 : i32
    return %c0_i32, %arg1 : i32, i32
  }
  func.func @transform_1(%arg0: i32, %arg1: i32, %arg2: memref<4xi32, #tpu.memory_space<smem>>) -> (i32, i32) {
    %c0_i32 = arith.constant 0 : i32
    %c0_i32_0 = arith.constant 0 : i32
    return %arg1, %c0_i32 : i32, i32
  }
  func.func @transform_2(%arg0: i32, %arg1: i32, %arg2: memref<4xi32, #tpu.memory_space<smem>>) -> (i32, i32, i32) {
    %0 = arith.index_cast %arg1 : i32 to index
    %1 = memref.load %arg2[%0] : memref<4xi32, #tpu.memory_space<smem>>
    %c0_i32 = arith.constant 0 : i32
    %c0_i32_0 = arith.constant 0 : i32
    %c0_i32_1 = arith.constant 0 : i32
    return %1, %c0_i32, %c0_i32_0 : i32, i32, i32
  }
  func.func @transform_3(%arg0: i32, %arg1: i32, %arg2: memref<4xi32, #tpu.memory_space<smem>>) -> (i32, i32) {
    %c0_i32 = arith.constant 0 : i32
    %c0_i32_0 = arith.constant 0 : i32
    return %arg1, %c0_i32 : i32, i32
  }
  func.func @transform_4(%arg0: i32, %arg1: i32, %arg2: memref<4xi32, #tpu.memory_space<smem>>) -> (i32, i32) {
    %c0_i32 = arith.constant 0 : i32
    %c0_i32_0 = arith.constant 0 : i32
    return %arg0, %c0_i32 : i32, i32
  }
}

</mosaic_0001>

<llo_original>
// kernel: tpu_custom_call.1
$region0: #{tpu_custom_call.1}
  #allocation0 [shape = 'u32[]', space=smem, size = 0x4, offset = 0x4, fixed_abs, tag = 'smem constant byte address 0x4 - core index']
  #allocation1 [shape = 'u32[144,128]{1,0:T(1,128)}', space=vmem, size = 0x12000, scoped, tag = 'internal scratch']
  #allocation2 [shape = 's32[1]{0}', space=sflag, size = 0x4, scoped, tag = 'scoped memory for tpu_custom_call.1']
  #allocation3 [shape = 'u8[512]{0}', space=smem, size = 0x200, scoped, tag = 'prefetched SMEM operand 0']
  %s0 = inlined_call_operand.vmem [shape: s32[4], index: 0, kind: input, shape index: {}]
  %s1 = inlined_call_operand.vmem [shape: s32[1,1024], index: 1, kind: input, shape index: {}]
  %s2 = inlined_call_operand.vmem [shape: bf16[1024,128], index: 2, kind: input, shape index: {}]
  %s3 = inlined_call_operand.vmem [shape: bf16[4,128,128], index: 3, kind: input, shape index: {}]
  %s4 = inlined_call_operand.vmem [shape: f32[1024,1], index: 4, kind: input, shape index: {}]
  %s5 = inlined_call_operand.hbm [shape: f32[16,128], index: 5, kind: output, shape index: {}]
  %s6 = sld [smem:[#allocation0]]
  $region57: #{tpu_custom_call.1} parent=0
    _
  %s8 = ssub.s32 1, %s6
  %s9 = scalar_select 0, %s8, %s6
  %s10 = sshll.u32 %s0, 4
  %s11 = int_to_ptr.vmem [resolvable:$true] %s10
  %13 = dma.vmem_to_smem %s11, 16, [#allocation3], [#allocation2]
  %14 = dma.done [#allocation2], 16
  %15 = sfence
  $region1: #{tpu_custom_call.1} parent=0
    #allocation4 [shape = 'u8[8192]{0}', space=vmem, size = 0x2000, scoped, tag = 'output window, operand 0']
    #allocation5 [shape = 's32[2]{0}', space=sflag, size = 0x8, scoped, tag = 'scoped memory for tpu_custom_call.1']
    %16 = vsyncpa [#allocation5], 0
    %s17 = scalar_lea.sflag [#allocation5], 1
    %18 = vsyncpa %s17, 0
    loop: start=0, step=1, limit=10
    $region2: #{tpu_custom_call.1} parent=1 // loop_pre_header
      _
    $region3: #{tpu_custom_call.1} parent=1 // loop_header
      %s20 = sphi 0, %s24
      %p21 = scmp.ge.s32.totalorder %s20, 10
      %s27 = sphi 0, %s39
      %s28 = sphi 0, %s35
      %s29 = sphi 0, %s27
      %s30 = sphi 0, %s28
      %s31 = sphi 0, %s29
      %s32 = sphi 0, %s30
      %s42 = sphi 0, %s44
      %s45 = sphi 0, %s42
      %s46 = sphi 0, %s45
      %s62 = sphi 0, %s46
      %s68 = sphi 0, %s70
      %s71 = sphi 0, %s68
      %s72 = sphi 0, %s71
      %s88 = sphi 0, %s72
      %s96 = sphi 0, %s98
      %s99 = sphi 0, %s96
      %s100 = sphi 0, %s99
      %s116 = sphi 0, %s100
      %s122 = sphi 0, %s124
      %s125 = sphi 0, %s122
      %s126 = sphi 0, %s125
      %s142 = sphi 0, %s126
      %s148 = sphi 0, %s150
      %s151 = sphi 0, %s148
      %s152 = sphi 0, %s151
      %s168 = sphi 0, %s152
    $region4: #{tpu_custom_call.1} parent=1 // loop_header_branch
      %23 = sbr.rel (%p21) target = $region8
    $region5: #{tpu_custom_call.1} parent=1 // loop_body
      %s25 = ssub.s32 %s20, 1
      %s26 = ssub.s32 %s20, 2
      %s33 = sadd.s32 1, %s28
      %p34 = scmp.ge.s32.totalorder %s33, 4
      %s35 = scalar_select %p34, 0, %s33
      %s36 = sadd.s32 1, %s27
      %s37 = scalar_select %p34, %s36, %s27
      %p38 = scmp.ge.s32.totalorder %s37, 2
      %s39 = scalar_select %p38, 0, %s37
      %s40 = ssub.s32 %s28, %s35
      %p41 = scmp.eq.s32.totalorder %s40, 0
      %s43 = sadd.s32 %s42, 1
      %s44 = scalar_select %p41, %s42, %s43
      %p47 = pneg %p41
      %p48 = scmp.eq.s32.totalorder %s20, 7
      %p49 = por %p47, %p48
      %p50 = scmp.ne.s32.totalorder %s42, %s45
      %p51 = scmp.eq.s32.totalorder %s20, 0
      %p52 = por %p50, %p51
      %p53 = scmp.ne.s32.totalorder %s42, %s45
      %p54 = scmp.eq.s32.totalorder %s25, 7
      %p55 = por %p53, %p54
      %p56 = scmp.ne.s32.totalorder %s45, %s46
      %p57 = scmp.eq.s32.totalorder %s25, 0
      %p58 = por %p56, %p57
      %p59 = scmp.ne.s32.totalorder %s45, %s46
      %p60 = scmp.eq.s32.totalorder %s26, 7
      %p61 = por %p59, %p60
      %p63 = scmp.ne.s32.totalorder %s46, %s62
      %p64 = scmp.eq.s32.totalorder %s26, 0
      %p65 = por %p63, %p64
      %s66 = ssub.s32 %s28, %s35
      %p67 = scmp.eq.s32.totalorder %s66, 0
      %s69 = sadd.s32 %s68, 1
      %s70 = scalar_select %p67, %s68, %s69
      %p73 = pneg %p67
      %p74 = scmp.eq.s32.totalorder %s20, 7
      %p75 = por %p73, %p74
      %p76 = scmp.ne.s32.totalorder %s68, %s71
      %p77 = scmp.eq.s32.totalorder %s20, 0
      %p78 = por %p76, %p77
      %p79 = scmp.ne.s32.totalorder %s68, %s71
      %p80 = scmp.eq.s32.totalorder %s25, 7
      %p81 = por %p79, %p80
      %p82 = scmp.ne.s32.totalorder %s71, %s72
      %p83 = scmp.eq.s32.totalorder %s25, 0
      %p84 = por %p82, %p83
      %p85 = scmp.ne.s32.totalorder %s71, %s72
      %p86 = scmp.eq.s32.totalorder %s26, 7
      %p87 = por %p85, %p86
      %p89 = scmp.ne.s32.totalorder %s72, %s88
      %p90 = scmp.eq.s32.totalorder %s26, 0
      %p91 = por %p89, %p90
      %s92 = sld [smem:[#allocation3 + %s28]]
      %s93 = sld [smem:[#allocation3 + %s35]]
      %s94 = ssub.s32 %s92, %s93
      %p95 = scmp.eq.s32.totalorder %s94, 0
      %s97 = sadd.s32 %s96, 1
      %s98 = scalar_select %p95, %s96, %s97
      %p101 = pneg %p95
      %p102 = scmp.eq.s32.totalorder %s20, 7
      %p103 = por %p101, %p102
      %p104 = scmp.ne.s32.totalorder %s96, %s99
      %p105 = scmp.eq.s32.totalorder %s20, 0
      %p106 = por %p104, %p105
      %p107 = scmp.ne.s32.totalorder %s96, %s99
      %p108 = scmp.eq.s32.totalorder %s25, 7
      %p109 = por %p107, %p108
      %p110 = scmp.ne.s32.totalorder %s99, %s100
      %p111 = scmp.eq.s32.totalorder %s25, 0
      %p112 = por %p110, %p111
      %p113 = scmp.ne.s32.totalorder %s99, %s100
      %p114 = scmp.eq.s32.totalorder %s26, 7
      %p115 = por %p113, %p114
      %p117 = scmp.ne.s32.totalorder %s100, %s116
      %p118 = scmp.eq.s32.totalorder %s26, 0
      %p119 = por %p117, %p118
      %s120 = ssub.s32 %s28, %s35
      %p121 = scmp.eq.s32.totalorder %s120, 0
      %s123 = sadd.s32 %s122, 1
      %s124 = scalar_select %p121, %s122, %s123
      %p127 = pneg %p121
      %p128 = scmp.eq.s32.totalorder %s20, 7
      %p129 = por %p127, %p128
      %p130 = scmp.ne.s32.totalorder %s122, %s125
      %p131 = scmp.eq.s32.totalorder %s20, 0
      %p132 = por %p130, %p131
      %p133 = scmp.ne.s32.totalorder %s122, %s125
      %p134 = scmp.eq.s32.totalorder %s25, 7
      %p135 = por %p133, %p134
      %p136 = scmp.ne.s32.totalorder %s125, %s126
      %p137 = scmp.eq.s32.totalorder %s25, 0
      %p138 = por %p136, %p137
      %p139 = scmp.ne.s32.totalorder %s125, %s126
      %p140 = scmp.eq.s32.totalorder %s26, 7
      %p141 = por %p139, %p140
      %p143 = scmp.ne.s32.totalorder %s126, %s142
      %p144 = scmp.eq.s32.totalorder %s26, 0
      %p145 = por %p143, %p144
      %s146 = ssub.s32 %s27, %s39
      %p147 = scmp.eq.s32.totalorder %s146, 0
      %s149 = sadd.s32 %s148, 1
      %s150 = scalar_select %p147, %s148, %s149
      %p153 = pneg %p147
      %p154 = scmp.eq.s32.totalorder %s20, 7
      %p155 = por %p153, %p154
      %p156 = scmp.ne.s32.totalorder %s148, %s151
      %p157 = scmp.eq.s32.totalorder %s20, 0
      %p158 = por %p156, %p157
      %p159 = scmp.ne.s32.totalorder %s148, %s151
      %p160 = scmp.eq.s32.totalorder %s25, 7
      %p161 = por %p159, %p160
      %p162 = scmp.ne.s32.totalorder %s151, %s152
      %p163 = scmp.eq.s32.totalorder %s25, 0
      %p164 = por %p162, %p163
      %p165 = scmp.ne.s32.totalorder %s151, %s152
      %p166 = scmp.eq.s32.totalorder %s26, 7
      %p167 = por %p165, %p166
      %p169 = scmp.ne.s32.totalorder %s152, %s168
      %p170 = scmp.eq.s32.totalorder %s26, 0
      %p171 = por %p169, %p170
      %p172 = scmp.le.s32.totalorder 1, %s20
      %p173 = scmp.lt.s32.totalorder %s20, 9
      %p174 = pnand %p172, %p173
      %p175 = pneg %p174
      // Predicated region
      $region9: #{tpu_custom_call.1} parent=5 // pred_check
        _
      $region10: #{tpu_custom_call.1} parent=5 // pred_check_branch
        %177 = sbr.rel (%p174) target = $region12
      $region11: #{tpu_custom_call.1} parent=5 // pred_region
        %s178 = ssub.s32 %s20, 1
      $region12: #{tpu_custom_call.1} parent=5 // pred_fallthru
        _
      %p179 = scmp.lt.s32.totalorder %s20, 8
      // Predicated region
      $region13: #{tpu_custom_call.1} parent=5 // pred_check
        %p180 = pneg %p179
      $region14: #{tpu_custom_call.1} parent=5 // pred_check_branch
        %182 = sbr.rel (%p180) target = $region16
      $region15: #{tpu_custom_call.1} parent=5 // pred_region
        // Predicated region
        $region17: #{tpu_custom_call.1} parent=15 // pred_check
          %p183 = pneg %p52
        $region18: #{tpu_custom_call.1} parent=15 // pred_check_branch
          %185 = sbr.rel (%p183) target = $region20
        $region19: #{tpu_custom_call.1} parent=15 // pred_region
          %s186 = smul.u32 2, %s28
          %p187 = scmp.lt.s32.totalorder %s186, 7
          %s188 = scalar_select %p187, %s186, 7
          %s189 = scalar_lea.vmem %s1, %s188
          %s190 = smul.u32 2, %s28
        $region20: #{tpu_custom_call.1} parent=15 // pred_fallthru
          _
        // Predicated region
        $region21: #{tpu_custom_call.1} parent=15 // pred_check
          %p191 = pneg %p78
        $region22: #{tpu_custom_call.1} parent=15 // pred_check_branch
          %193 = sbr.rel (%p191) target = $region24
        $region23: #{tpu_custom_call.1} parent=15 // pred_region
          %s194 = smul.u32 32, %s28
          %p195 = scmp.lt.s32.totalorder %s194, 127
          %s196 = scalar_select %p195, %s194, 127
          %s197 = smul.addr %s196, 4
          %s198 = scalar_lea.vmem %s2, %s197
          %s199 = smul.u32 32, %s28
        $region24: #{tpu_custom_call.1} parent=15 // pred_fallthru
          _
        // Predicated region
        $region25: #{tpu_custom_call.1} parent=15 // pred_check
          %p200 = pneg %p106
        $region26: #{tpu_custom_call.1} parent=15 // pred_check_branch
          %202 = sbr.rel (%p200) target = $region28
        $region27: #{tpu_custom_call.1} parent=15 // pred_region
          %s203 = sld [smem:[#allocation3 + %s28]]
          %p204 = scmp.lt.s32.totalorder %s203, 3
          %s205 = scalar_select %p204, %s203, 3
          %s206 = smul.addr %s205, 16
          %s207 = smul.addr %s206, 4
          %s208 = scalar_lea.vmem %s3, %s207
          %s209 = sld [smem:[#allocation3 + %s28]]
        $region28: #{tpu_custom_call.1} parent=15 // pred_fallthru
          _
        // Predicated region
        $region29: #{tpu_custom_call.1} parent=15 // pred_check
          %p210 = pneg %p132
        $region30: #{tpu_custom_call.1} parent=15 // pred_check_branch
          %212 = sbr.rel (%p210) target = $region32
        $region31: #{tpu_custom_call.1} parent=15 // pred_region
          %s213 = smul.u32 32, %s28
          %p214 = scmp.lt.s32.totalorder %s213, 127
          %s215 = scalar_select %p214, %s213, 127
          %s216 = smul.addr %s215, 8
          %s217 = scalar_lea.vmem %s4, %s216
          %s218 = smul.u32 32, %s28
        $region32: #{tpu_custom_call.1} parent=15 // pred_fallthru
          _
      $region16: #{tpu_custom_call.1} parent=5 // pred_fallthru
        _
      %p219 = scmp.le.s32.totalorder 1, %s20
      %p220 = scmp.lt.s32.totalorder %s20, 9
      %p221 = pnand %p219, %p220
      %p222 = pneg %p221
      // Predicated region
      $region33: #{tpu_custom_call.1} parent=5 // pred_check
        _
      $region34: #{tpu_custom_call.1} parent=5 // pred_check_branch
        %224 = sbr.rel (%p221) target = $region36
      $region35: #{tpu_custom_call.1} parent=5 // pred_region
        %s225 = ssub.s32 %s20, 1
        %s226 = smul.u32 2, %s30
        %p227 = scmp.lt.s32.totalorder %s226, 7
        %s228 = scalar_select %p227, %s226, 7
        %s229 = scalar_lea.vmem %s1, %s228
        %p230 = pneg %p58
        %p231 = pneg %p55
        %s232 = smul.u32 32, %s30
        %p233 = scmp.lt.s32.totalorder %s232, 127
        %s234 = scalar_select %p233, %s232, 127
        %s235 = smul.addr %s234, 4
        %s236 = scalar_lea.vmem %s2, %s235
        %p237 = pneg %p84
        %p238 = pneg %p81
        %s239 = sld [smem:[#allocation3 + %s30]]
        %p240 = scmp.lt.s32.totalorder %s239, 3
        %s241 = scalar_select %p240, %s239, 3
        %s242 = smul.addr %s241, 16
        %s243 = smul.addr %s242, 4
        %s244 = scalar_lea.vmem %s3, %s243
        %p245 = pneg %p112
        %p246 = pneg %p109
        %s247 = smul.u32 32, %s30
        %p248 = scmp.lt.s32.totalorder %s247, 127
        %s249 = scalar_select %p248, %s247, 127
        %s250 = smul.addr %s249, 8
        %s251 = scalar_lea.vmem %s4, %s250
        %p252 = pneg %p138
        %p253 = pneg %p135
        %p254 = pneg %p164
        %p255 = pneg %p161
        %s256 = sand.u32 %s151, 1
        %s257 = scalar_lea.sflag [#allocation5], %s256
        %s258 = sand.u32 %s151, 1
        %s259 = smul.addr %s258, 8
        %s260 = scalar_lea.vmem [#allocation4], %s259
        %s261 = smul.u32 2, %s30
        %p262 = scmp.lt.s32.totalorder %s261, 7
        %s263 = scalar_select %p262, %s261, 7
        %s264 = scalar_lea.vmem %s1, %s263
        %s265 = smul.u32 2, %s30
        %s266 = smul.u32 32, %s30
        %p267 = scmp.lt.s32.totalorder %s266, 127
        %s268 = scalar_select %p267, %s266, 127
        %s269 = smul.addr %s268, 4
        %s270 = scalar_lea.vmem %s2, %s269
        %s271 = smul.u32 32, %s30
        %s272 = sld [smem:[#allocation3 + %s30]]
        %p273 = scmp.lt.s32.totalorder %s272, 3
        %s274 = scalar_select %p273, %s272, 3
        %s275 = smul.addr %s274, 16
        %s276 = smul.addr %s275, 4
        %s277 = scalar_lea.vmem %s3, %s276
        %s278 = sld [smem:[#allocation3 + %s30]]
        %s279 = smul.u32 32, %s30
        %p280 = scmp.lt.s32.totalorder %s279, 127
        %s281 = scalar_select %p280, %s279, 127
        %s282 = smul.addr %s281, 8
        %s283 = scalar_lea.vmem %s4, %s282
        %s284 = smul.u32 32, %s30
        %p286 = scmp.eq.s32.totalorder %s30, 0
        // Predicated region
        $region37: #{tpu_custom_call.1} parent=35 // pred_check
          %p287 = pneg %p286
        $region38: #{tpu_custom_call.1} parent=35 // pred_check_branch
          %289 = sbr.rel (%p287) target = $region40
        $region39: #{tpu_custom_call.1} parent=35 // pred_region
          %290 = vst [vmem:[%s260] sm:$0xff] 0.0
        $region40: #{tpu_custom_call.1} parent=35 // pred_fallthru
          _
        %v291 = vld [vmem:[%s270] sm:$0xf]
        %v292 = vld [vmem:[%s270 + $0x4] sm:$0xf]
        %v293 = vld [vmem:[%s270 + $0x8] sm:$0xf]
        %v294 = vld [vmem:[%s270 + $0xc] sm:$0xf]
        %v295 = vld [vmem:[%s270 + $0x10] sm:$0xf]
        %v296 = vld [vmem:[%s270 + $0x14] sm:$0xf]
        %v297 = vld [vmem:[%s270 + $0x18] sm:$0xf]
        %v298 = vld [vmem:[%s270 + $0x1c] sm:$0xf]
        %v299 = vld [vmem:[%s270 + $0x20] sm:$0xf]
        %v300 = vld [vmem:[%s270 + $0x24] sm:$0xf]
        %v301 = vld [vmem:[%s270 + $0x28] sm:$0xf]
        %v302 = vld [vmem:[%s270 + $0x2c] sm:$0xf]
        %v303 = vld [vmem:[%s270 + $0x30] sm:$0xf]
        %v304 = vld [vmem:[%s270 + $0x34] sm:$0xf]
        %v305 = vld [vmem:[%s270 + $0x38] sm:$0xf]
        %v306 = vld [vmem:[%s270 + $0x3c] sm:$0xf]
        %v307 = vld [vmem:[%s270 + $0x40] sm:$0xf]
        %v308 = vld [vmem:[%s270 + $0x44] sm:$0xf]
        %v309 = vld [vmem:[%s270 + $0x48] sm:$0xf]
        %v310 = vld [vmem:[%s270 + $0x4c] sm:$0xf]
        %v311 = vld [vmem:[%s270 + $0x50] sm:$0xf]
        %v312 = vld [vmem:[%s270 + $0x54] sm:$0xf]
        %v313 = vld [vmem:[%s270 + $0x58] sm:$0xf]
        %v314 = vld [vmem:[%s270 + $0x5c] sm:$0xf]
        %v315 = vld [vmem:[%s270 + $0x60] sm:$0xf]
        %v316 = vld [vmem:[%s270 + $0x64] sm:$0xf]
        %v317 = vld [vmem:[%s270 + $0x68] sm:$0xf]
        %v318 = vld [vmem:[%s270 + $0x6c] sm:$0xf]
        %v319 = vld [vmem:[%s270 + $0x70] sm:$0xf]
        %v320 = vld [vmem:[%s270 + $0x74] sm:$0xf]
        %v321 = vld [vmem:[%s270 + $0x78] sm:$0xf]
        %v322 = vld [vmem:[%s270 + $0x7c] sm:$0xf]
        %v323 = vld [vmem:[%s277] sm:$0xf]
        %v324 = vld [vmem:[%s277 + $0x4] sm:$0xf]
        %v325 = vld [vmem:[%s277 + $0x8] sm:$0xf]
        %v326 = vld [vmem:[%s277 + $0xc] sm:$0xf]
        %v327 = vld [vmem:[%s277 + $0x10] sm:$0xf]
        %v328 = vld [vmem:[%s277 + $0x14] sm:$0xf]
        %v329 = vld [vmem:[%s277 + $0x18] sm:$0xf]
        %v330 = vld [vmem:[%s277 + $0x1c] sm:$0xf]
        %v331 = vld [vmem:[%s277 + $0x20] sm:$0xf]
        %v332 = vld [vmem:[%s277 + $0x24] sm:$0xf]
        %v333 = vld [vmem:[%s277 + $0x28] sm:$0xf]
        %v334 = vld [vmem:[%s277 + $0x2c] sm:$0xf]
        %v335 = vld [vmem:[%s277 + $0x30] sm:$0xf]
        %v336 = vld [vmem:[%s277 + $0x34] sm:$0xf]
        %v337 = vld [vmem:[%s277 + $0x38] sm:$0xf]
        %v338 = vld [vmem:[%s277 + $0x3c] sm:$0xf]
        %v371 = vunpack.c.l.b16 %v291
        %v372 = vunpack.c.l.b16 %v292
        %v373 = vunpack.c.l.b16 %v293
        %v374 = vunpack.c.l.b16 %v294
        %v375 = vunpack.c.l.b16 %v295
        %v376 = vunpack.c.l.b16 %v296
        %v377 = vunpack.c.l.b16 %v297
        %v378 = vunpack.c.l.b16 %v298
        %v379 = vunpack.c.l.b16 %v299
        %v380 = vunpack.c.l.b16 %v300
        %v381 = vunpack.c.l.b16 %v301
        %v382 = vunpack.c.l.b16 %v302
        %v383 = vunpack.c.l.b16 %v303
        %v384 = vunpack.c.l.b16 %v304
        %v385 = vunpack.c.l.b16 %v305
        %v386 = vunpack.c.l.b16 %v306
        %v387 = vunpack.c.l.b16 %v307
        %v388 = vunpack.c.l.b16 %v308
        %v389 = vunpack.c.l.b16 %v309
        %v390 = vunpack.c.l.b16 %v310
        %v391 = vunpack.c.l.b16 %v311
        %v392 = vunpack.c.l.b16 %v312
        %v393 = vunpack.c.l.b16 %v313
        %v394 = vunpack.c.l.b16 %v314
        %v395 = vunpack.c.l.b16 %v315
        %v396 = vunpack.c.l.b16 %v316
        %v397 = vunpack.c.l.b16 %v317
        %v398 = vunpack.c.l.b16 %v318
        %v399 = vunpack.c.l.b16 %v319
        %v400 = vunpack.c.l.b16 %v320
        %v401 = vunpack.c.l.b16 %v321
        %v402 = vunpack.c.l.b16 %v322
        %v403 = vpack.c.b16 %v372, %v371
        %v404 = vpack.c.b16 %v374, %v373
        %v405 = vpack.c.b16 %v376, %v375
        %v406 = vpack.c.b16 %v378, %v377
        %v407 = vpack.c.b16 %v380, %v379
        %v408 = vpack.c.b16 %v382, %v381
        %v409 = vpack.c.b16 %v384, %v383
        %v410 = vpack.c.b16 %v386, %v385
        %v411 = vpack.c.b16 %v388, %v387
        %v412 = vpack.c.b16 %v390, %v389
        %v413 = vpack.c.b16 %v392, %v391
        %v414 = vpack.c.b16 %v394, %v393
        %v415 = vpack.c.b16 %v396, %v395
        %v416 = vpack.c.b16 %v398, %v397
        %v417 = vpack.c.b16 %v400, %v399
        %v418 = vpack.c.b16 %v402, %v401
        %v451 = vunpack.c.l.b16 %v323
        %v452 = vunpack.c.l.b16 %v324
        %v453 = vunpack.c.l.b16 %v325
        %v454 = vunpack.c.l.b16 %v326
        %v455 = vunpack.c.l.b16 %v327
        %v456 = vunpack.c.l.b16 %v328
        %v457 = vunpack.c.l.b16 %v329
        %v458 = vunpack.c.l.b16 %v330
        %v459 = vunpack.c.l.b16 %v331
        %v460 = vunpack.c.l.b16 %v332
        %v461 = vunpack.c.l.b16 %v333
        %v462 = vunpack.c.l.b16 %v334
        %v463 = vunpack.c.l.b16 %v335
        %v464 = vunpack.c.l.b16 %v336
        %v465 = vunpack.c.l.b16 %v337
        %v466 = vunpack.c.l.b16 %v338
        %v467 = vpack.c.b16 %v452, %v451
        %v468 = vpack.c.b16 %v454, %v453
        %v469 = vpack.c.b16 %v456, %v455
        %v470 = vpack.c.b16 %v458, %v457
        %v471 = vpack.c.b16 %v460, %v459
        %v472 = vpack.c.b16 %v462, %v461
        %v473 = vpack.c.b16 %v464, %v463
        %v474 = vpack.c.b16 %v466, %v465
        %483 = vmatprep.subr.bf16.mxu0 0
        %484 = vmatpush1.bf16.msra.mxu0 %v467
        %485 = vmatprep.subr.bf16.mxu0 0
        %486 = vmatpush1.bf16.msra.mxu0 %v468
        %487 = vmatprep.subr.bf16.mxu0 0
        %488 = vmatpush1.bf16.msra.mxu0 %v469
        %489 = vmatprep.subr.bf16.mxu0 0
        %490 = vmatpush1.bf16.msra.mxu0 %v470
        %491 = vmatprep.subr.bf16.mxu0 0
        %492 = vmatpush1.bf16.msra.mxu0 %v471
        %493 = vmatprep.subr.bf16.mxu0 0
        %494 = vmatpush1.bf16.msra.mxu0 %v472
        %495 = vmatprep.subr.bf16.mxu0 0
        %496 = vmatpush1.bf16.msra.mxu0 %v473
        %497 = vmatprep.subr.bf16.mxu0 0
        %498 = vmatpush1.bf16.msra.mxu0 %v474
        %499 = vmatprep.subr.bf16.mxu0 0
        %500 = vmatpush1.bf16.msra.mxu0 0
        %501 = vmatprep.subr.bf16.mxu0 0
        %502 = vmatpush1.bf16.msra.mxu0 0
        %503 = vmatprep.subr.bf16.mxu0 0
        %504 = vmatpush1.bf16.msra.mxu0 0
        %505 = vmatprep.subr.bf16.mxu0 0
        %506 = vmatpush1.bf16.msra.mxu0 0
        %507 = vmatprep.subr.bf16.mxu0 0
        %508 = vmatpush1.bf16.msra.mxu0 0
        %509 = vmatprep.subr.bf16.mxu0 0
        %510 = vmatpush1.bf16.msra.mxu0 0
        %511 = vmatprep.subr.bf16.mxu0 0
        %512 = vmatpush1.bf16.msra.mxu0 0
        %513 = vmatprep.subr.bf16.mxu0 0
        %514 = vmatpush1.bf16.msra.mxu0 0
        %515 = vmatprep.mubr.bf16.mxu0 0
        %516 = vmatmul.mubr.bf16.gmra.mrb[0].mxu0 %v403
        %v517 = vpop.f32.mrb[0].mxu0
        %v518 = vadd.f32 0.0, %v517
        %v519 = vpop.f32.mrb[0].mxu0
        %v520 = vpop.f32.mrb[0].mxu0
        %v521 = vadd.f32 0.0, %v520
        %v522 = vpop.f32.mrb[0].mxu0
        %523 = vmatprep.mubr.bf16.mxu0 0
        %524 = vmatmul.mubr.bf16.gmra.mrb[0].mxu0 %v404
        %v525 = vpop.f32.mrb[0].mxu0
        %v526 = vadd.f32 0.0, %v525
        %v527 = vpop.f32.mrb[0].mxu0
        %v528 = vpop.f32.mrb[0].mxu0
        %v529 = vadd.f32 0.0, %v528
        %v530 = vpop.f32.mrb[0].mxu0
        %531 = vmatprep.mubr.bf16.mxu0 0
        %532 = vmatmul.mubr.bf16.gmra.mrb[0].mxu0 %v405
        %v533 = vpop.f32.mrb[0].mxu0
        %v534 = vadd.f32 0.0, %v533
        %v535 = vpop.f32.mrb[0].mxu0
        %v536 = vpop.f32.mrb[0].mxu0
        %v537 = vadd.f32 0.0, %v536
        %v538 = vpop.f32.mrb[0].mxu0
        %539 = vmatprep.mubr.bf16.mxu0 0
        %540 = vmatmul.mubr.bf16.gmra.mrb[0].mxu0 %v406
        %v541 = vpop.f32.mrb[0].mxu0
        %v542 = vadd.f32 0.0, %v541
        %v543 = vpop.f32.mrb[0].mxu0
        %v544 = vpop.f32.mrb[0].mxu0
        %v545 = vadd.f32 0.0, %v544
        %v546 = vpop.f32.mrb[0].mxu0
        %547 = vmatprep.mubr.bf16.mxu0 0
        %548 = vmatmul.mubr.bf16.gmra.mrb[0].mxu0 %v407
        %v549 = vpop.f32.mrb[0].mxu0
        %v550 = vadd.f32 0.0, %v549
        %v551 = vpop.f32.mrb[0].mxu0
        %v552 = vpop.f32.mrb[0].mxu0
        %v553 = vadd.f32 0.0, %v552
        %v554 = vpop.f32.mrb[0].mxu0
        %555 = vmatprep.mubr.bf16.mxu0 0
        %556 = vmatmul.mubr.bf16.gmra.mrb[0].mxu0 %v408
        %v557 = vpop.f32.mrb[0].mxu0
        %v558 = vadd.f32 0.0, %v557
        %v559 = vpop.f32.mrb[0].mxu0
        %v560 = vpop.f32.mrb[0].mxu0
        %v561 = vadd.f32 0.0, %v560
        %v562 = vpop.f32.mrb[0].mxu0
        %563 = vmatprep.mubr.bf16.mxu0 0
        %564 = vmatmul.mubr.bf16.gmra.mrb[0].mxu0 %v409
        %v565 = vpop.f32.mrb[0].mxu0
        %v566 = vadd.f32 0.0, %v565
        %v567 = vpop.f32.mrb[0].mxu0
        %v568 = vpop.f32.mrb[0].mxu0
        %v569 = vadd.f32 0.0, %v568
        %v570 = vpop.f32.mrb[0].mxu0
        %571 = vmatprep.mubr.bf16.mxu0 0
        %572 = vmatmul.mubr.bf16.gmra.mrb[0].mxu0 %v410
        %v573 = vpop.f32.mrb[0].mxu0
        %v574 = vadd.f32 0.0, %v573
        %v575 = vpop.f32.mrb[0].mxu0
        %v576 = vpop.f32.mrb[0].mxu0
        %v577 = vadd.f32 0.0, %v576
        %v578 = vpop.f32.mrb[0].mxu0
        %579 = vmatprep.mubr.bf16.mxu0 0
        %580 = vmatmul.mubr.bf16.gmra.mrb[0].mxu0 %v411
        %v581 = vpop.f32.mrb[0].mxu0
        %v582 = vadd.f32 0.0, %v581
        %v583 = vpop.f32.mrb[0].mxu0
        %v584 = vpop.f32.mrb[0].mxu0
        %v585 = vadd.f32 0.0, %v584
        %v586 = vpop.f32.mrb[0].mxu0
        %587 = vmatprep.mubr.bf16.mxu0 0
        %588 = vmatmul.mubr.bf16.gmra.mrb[0].mxu0 %v412
        %v589 = vpop.f32.mrb[0].mxu0
        %v590 = vadd.f32 0.0, %v589
        %v591 = vpop.f32.mrb[0].mxu0
        %v592 = vpop.f32.mrb[0].mxu0
        %v593 = vadd.f32 0.0, %v592
        %v594 = vpop.f32.mrb[0].mxu0
        %595 = vmatprep.mubr.bf16.mxu0 0
        %596 = vmatmul.mubr.bf16.gmra.mrb[0].mxu0 %v413
        %v597 = vpop.f32.mrb[0].mxu0
        %v598 = vadd.f32 0.0, %v597
        %v599 = vpop.f32.mrb[0].mxu0
        %v600 = vpop.f32.mrb[0].mxu0
        %v601 = vadd.f32 0.0, %v600
        %v602 = vpop.f32.mrb[0].mxu0
        %603 = vmatprep.mubr.bf16.mxu0 0
        %604 = vmatmul.mubr.bf16.gmra.mrb[0].mxu0 %v414
        %v605 = vpop.f32.mrb[0].mxu0
        %v606 = vadd.f32 0.0, %v605
        %v607 = vpop.f32.mrb[0].mxu0
        %v608 = vpop.f32.mrb[0].mxu0
        %v609 = vadd.f32 0.0, %v608
        %v610 = vpop.f32.mrb[0].mxu0
        %611 = vmatprep.mubr.bf16.mxu0 0
        %612 = vmatmul.mubr.bf16.gmra.mrb[0].mxu0 %v415
        %v613 = vpop.f32.mrb[0].mxu0
        %v614 = vadd.f32 0.0, %v613
        %v615 = vpop.f32.mrb[0].mxu0
        %v616 = vpop.f32.mrb[0].mxu0
        %v617 = vadd.f32 0.0, %v616
        %v618 = vpop.f32.mrb[0].mxu0
        %619 = vmatprep.mubr.bf16.mxu0 0
        %620 = vmatmul.mubr.bf16.gmra.mrb[0].mxu0 %v416
        %v621 = vpop.f32.mrb[0].mxu0
        %v622 = vadd.f32 0.0, %v621
        %v623 = vpop.f32.mrb[0].mxu0
        %v624 = vpop.f32.mrb[0].mxu0
        %v625 = vadd.f32 0.0, %v624
        %v626 = vpop.f32.mrb[0].mxu0
        %627 = vmatprep.mubr.bf16.mxu0 0
        %628 = vmatmul.mubr.bf16.gmra.mrb[0].mxu0 %v417
        %v629 = vpop.f32.mrb[0].mxu0
        %v630 = vadd.f32 0.0, %v629
        %v631 = vpop.f32.mrb[0].mxu0
        %v632 = vpop.f32.mrb[0].mxu0
        %v633 = vadd.f32 0.0, %v632
        %v634 = vpop.f32.mrb[0].mxu0
        %635 = vmatprep.mubr.bf16.mxu0 0
        %636 = vmatmul.mubr.bf16.gmra.mrb[0].mxu0 %v418
        %v637 = vpop.f32.mrb[0].mxu0
        %v638 = vadd.f32 0.0, %v637
        %v639 = vpop.f32.mrb[0].mxu0
        %v640 = vpop.f32.mrb[0].mxu0
        %v641 = vadd.f32 0.0, %v640
        %v642 = vpop.f32.mrb[0].mxu0
        %643 = vdwg.mxu0
        %v644 = vxor.u32 %v518, 2147483648
        %v645 = vxor.u32 %v521, 2147483648
        %v646 = vxor.u32 %v526, 2147483648
        %v647 = vxor.u32 %v529, 2147483648
        %v648 = vxor.u32 %v534, 2147483648
        %v649 = vxor.u32 %v537, 2147483648
        %v650 = vxor.u32 %v542, 2147483648
        %v651 = vxor.u32 %v545, 2147483648
        %v652 = vxor.u32 %v550, 2147483648
        %v653 = vxor.u32 %v553, 2147483648
        %v654 = vxor.u32 %v558, 2147483648
        %v655 = vxor.u32 %v561, 2147483648
        %v656 = vxor.u32 %v566, 2147483648
        %v657 = vxor.u32 %v569, 2147483648
        %v658 = vxor.u32 %v574, 2147483648
        %v659 = vxor.u32 %v577, 2147483648
        %v660 = vxor.u32 %v582, 2147483648
        %v661 = vxor.u32 %v585, 2147483648
        %v662 = vxor.u32 %v590, 2147483648
        %v663 = vxor.u32 %v593, 2147483648
        %v664 = vxor.u32 %v598, 2147483648
        %v665 = vxor.u32 %v601, 2147483648
        %v666 = vxor.u32 %v606, 2147483648
        %v667 = vxor.u32 %v609, 2147483648
        %v668 = vxor.u32 %v614, 2147483648
        %v669 = vxor.u32 %v617, 2147483648
        %v670 = vxor.u32 %v622, 2147483648
        %v671 = vxor.u32 %v625, 2147483648
        %v672 = vxor.u32 %v630, 2147483648
        %v673 = vxor.u32 %v633, 2147483648
        %v674 = vxor.u32 %v638, 2147483648
        %v675 = vxor.u32 %v641, 2147483648
        %v676 = vmul.f32 %v644, 1.442695
        %v677 = vpow.pop %v676
        %v678 = vmul.f32 %v645, 1.442695
        %v679 = vpow.pop %v678
        %v680 = vmul.f32 %v646, 1.442695
        %v681 = vpow.pop %v680
        %v682 = vmul.f32 %v647, 1.442695
        %v683 = vpow.pop %v682
        %v684 = vmul.f32 %v648, 1.442695
        %v685 = vpow.pop %v684
        %v686 = vmul.f32 %v649, 1.442695
        %v687 = vpow.pop %v686
        %v688 = vmul.f32 %v650, 1.442695
        %v689 = vpow.pop %v688
        %v690 = vmul.f32 %v651, 1.442695
        %v691 = vpow.pop %v690
        %v692 = vmul.f32 %v652, 1.442695
        %v693 = vpow.pop %v692
        %v694 = vmul.f32 %v653, 1.442695
        %v695 = vpow.pop %v694
        %v696 = vmul.f32 %v654, 1.442695
        %v697 = vpow.pop %v696
        %v698 = vmul.f32 %v655, 1.442695
        %v699 = vpow.pop %v698
        %v700 = vmul.f32 %v656, 1.442695
        %v701 = vpow.pop %v700
        %v702 = vmul.f32 %v657, 1.442695
        %v703 = vpow.pop %v702
        %v704 = vmul.f32 %v658, 1.442695
        %v705 = vpow.pop %v704
        %v706 = vmul.f32 %v659, 1.442695
        %v707 = vpow.pop %v706
        %v708 = vmul.f32 %v660, 1.442695
        %v709 = vpow.pop %v708
        %v710 = vmul.f32 %v661, 1.442695
        %v711 = vpow.pop %v710
        %v712 = vmul.f32 %v662, 1.442695
        %v713 = vpow.pop %v712
        %v714 = vmul.f32 %v663, 1.442695
        %v715 = vpow.pop %v714
        %v716 = vmul.f32 %v664, 1.442695
        %v717 = vpow.pop %v716
        %v718 = vmul.f32 %v665, 1.442695
        %v719 = vpow.pop %v718
        %v720 = vmul.f32 %v666, 1.442695
        %v721 = vpow.pop %v720
        %v722 = vmul.f32 %v667, 1.442695
        %v723 = vpow.pop %v722
        %v724 = vmul.f32 %v668, 1.442695
        %v725 = vpow.pop %v724
        %v726 = vmul.f32 %v669, 1.442695
        %v727 = vpow.pop %v726
        %v728 = vmul.f32 %v670, 1.442695
        %v729 = vpow.pop %v728
        %v730 = vmul.f32 %v671, 1.442695
        %v731 = vpow.pop %v730
        %v732 = vmul.f32 %v672, 1.442695
        %v733 = vpow.pop %v732
        %v734 = vmul.f32 %v673, 1.442695
        %v735 = vpow.pop %v734
        %v736 = vmul.f32 %v674, 1.442695
        %v737 = vpow.pop %v736
        %v738 = vmul.f32 %v675, 1.442695
        %v739 = vpow.pop %v738
        %v740 = vadd.f32 %v677, 1.0
        %v741 = vadd.f32 %v679, 1.0
        %v742 = vadd.f32 %v681, 1.0
        %v743 = vadd.f32 %v683, 1.0
        %v744 = vadd.f32 %v685, 1.0
        %v745 = vadd.f32 %v687, 1.0
        %v746 = vadd.f32 %v689, 1.0
        %v747 = vadd.f32 %v691, 1.0
        %v748 = vadd.f32 %v693, 1.0
        %v749 = vadd.f32 %v695, 1.0
        %v750 = vadd.f32 %v697, 1.0
        %v751 = vadd.f32 %v699, 1.0
        %v752 = vadd.f32 %v701, 1.0
        %v753 = vadd.f32 %v703, 1.0
        %v754 = vadd.f32 %v705, 1.0
        %v755 = vadd.f32 %v707, 1.0
        %v756 = vadd.f32 %v709, 1.0
        %v757 = vadd.f32 %v711, 1.0
        %v758 = vadd.f32 %v713, 1.0
        %v759 = vadd.f32 %v715, 1.0
        %v760 = vadd.f32 %v717, 1.0
        %v761 = vadd.f32 %v719, 1.0
        %v762 = vadd.f32 %v721, 1.0
        %v763 = vadd.f32 %v723, 1.0
        %v764 = vadd.f32 %v725, 1.0
        %v765 = vadd.f32 %v727, 1.0
        %v766 = vadd.f32 %v729, 1.0
        %v767 = vadd.f32 %v731, 1.0
        %v768 = vadd.f32 %v733, 1.0
        %v769 = vadd.f32 %v735, 1.0
        %v770 = vadd.f32 %v737, 1.0
        %v771 = vadd.f32 %v739, 1.0
        %v772 = vrcp.pop %v740
        %v773 = vmul.f32 1.0, %v772
        %v774 = vrcp.pop %v741
        %v775 = vmul.f32 1.0, %v774
        %v776 = vrcp.pop %v742
        %v777 = vmul.f32 1.0, %v776
        %v778 = vrcp.pop %v743
        %v779 = vmul.f32 1.0, %v778
        %v780 = vrcp.pop %v744
        %v781 = vmul.f32 1.0, %v780
        %v782 = vrcp.pop %v745
        %v783 = vmul.f32 1.0, %v782
        %v784 = vrcp.pop %v746
        %v785 = vmul.f32 1.0, %v784
        %v786 = vrcp.pop %v747
        %v787 = vmul.f32 1.0, %v786
        %v788 = vrcp.pop %v748
        %v789 = vmul.f32 1.0, %v788
        %v790 = vrcp.pop %v749
        %v791 = vmul.f32 1.0, %v790
        %v792 = vrcp.pop %v750
        %v793 = vmul.f32 1.0, %v792
        %v794 = vrcp.pop %v751
        %v795 = vmul.f32 1.0, %v794
        %v796 = vrcp.pop %v752
        %v797 = vmul.f32 1.0, %v796
        %v798 = vrcp.pop %v753
        %v799 = vmul.f32 1.0, %v798
        %v800 = vrcp.pop %v754
        %v801 = vmul.f32 1.0, %v800
        %v802 = vrcp.pop %v755
        %v803 = vmul.f32 1.0, %v802
        %v804 = vrcp.pop %v756
        %v805 = vmul.f32 1.0, %v804
        %v806 = vrcp.pop %v757
        %v807 = vmul.f32 1.0, %v806
        %v808 = vrcp.pop %v758
        %v809 = vmul.f32 1.0, %v808
        %v810 = vrcp.pop %v759
        %v811 = vmul.f32 1.0, %v810
        %v812 = vrcp.pop %v760
        %v813 = vmul.f32 1.0, %v812
        %v814 = vrcp.pop %v761
        %v815 = vmul.f32 1.0, %v814
        %v816 = vrcp.pop %v762
        %v817 = vmul.f32 1.0, %v816
        %v818 = vrcp.pop %v763
        %v819 = vmul.f32 1.0, %v818
        %v820 = vrcp.pop %v764
        %v821 = vmul.f32 1.0, %v820
        %v822 = vrcp.pop %v765
        %v823 = vmul.f32 1.0, %v822
        %v824 = vrcp.pop %v766
        %v825 = vmul.f32 1.0, %v824
        %v826 = vrcp.pop %v767
        %v827 = vmul.f32 1.0, %v826
        %v828 = vrcp.pop %v768
        %v829 = vmul.f32 1.0, %v828
        %v830 = vrcp.pop %v769
        %v831 = vmul.f32 1.0, %v830
        %v832 = vrcp.pop %v770
        %v833 = vmul.f32 1.0, %v832
        %v834 = vrcp.pop %v771
        %v835 = vmul.f32 1.0, %v834
        %v836 = vld [vmem:[%s283] sm:$0xff]
        %v837 = vld [vmem:[%s283 + $0x8] sm:$0xff]
        %v838 = vld [vmem:[%s283 + $0x10] sm:$0xff]
        %v839 = vld [vmem:[%s283 + $0x18] sm:$0xff]
        %v840 = vld [vmem:[%s283 + $0x20] sm:$0xff]
        %v841 = vld [vmem:[%s283 + $0x28] sm:$0xff]
        %v842 = vld [vmem:[%s283 + $0x30] sm:$0xff]
        %v843 = vld [vmem:[%s283 + $0x38] sm:$0xff]
        %v844 = vld [vmem:[%s283 + $0x40] sm:$0xff]
        %v845 = vld [vmem:[%s283 + $0x48] sm:$0xff]
        %v846 = vld [vmem:[%s283 + $0x50] sm:$0xff]
        %v847 = vld [vmem:[%s283 + $0x58] sm:$0xff]
        %v848 = vld [vmem:[%s283 + $0x60] sm:$0xff]
        %v849 = vld [vmem:[%s283 + $0x68] sm:$0xff]
        %v850 = vld [vmem:[%s283 + $0x70] sm:$0xff]
        %v851 = vld [vmem:[%s283 + $0x78] sm:$0xff]
        %v852 = vld [vmem:[%s283 + $0x80] sm:$0xff]
        %v853 = vld [vmem:[%s283 + $0x88] sm:$0xff]
        %v854 = vld [vmem:[%s283 + $0x90] sm:$0xff]
        %v855 = vld [vmem:[%s283 + $0x98] sm:$0xff]
        %v856 = vld [vmem:[%s283 + $0xa0] sm:$0xff]
        %v857 = vld [vmem:[%s283 + $0xa8] sm:$0xff]
        %v858 = vld [vmem:[%s283 + $0xb0] sm:$0xff]
        %v859 = vld [vmem:[%s283 + $0xb8] sm:$0xff]
        %v860 = vld [vmem:[%s283 + $0xc0] sm:$0xff]
        %v861 = vld [vmem:[%s283 + $0xc8] sm:$0xff]
        %v862 = vld [vmem:[%s283 + $0xd0] sm:$0xff]
        %v863 = vld [vmem:[%s283 + $0xd8] sm:$0xff]
        %v864 = vld [vmem:[%s283 + $0xe0] sm:$0xff]
        %v865 = vld [vmem:[%s283 + $0xe8] sm:$0xff]
        %v866 = vld [vmem:[%s283 + $0xf0] sm:$0xff]
        %v867 = vld [vmem:[%s283 + $0xf8] sm:$0xff]
        %900 = vrot.lane.b32.xlu0 %v836, 32
        %v901 = vpop.permute.xlu0 %900
        %902 = vrot.lane.b32.xlu0 %v837, 32
        %v903 = vpop.permute.xlu0 %902
        %904 = vrot.lane.b32.xlu0 %v838, 32
        %v905 = vpop.permute.xlu0 %904
        %906 = vrot.lane.b32.xlu0 %v839, 32
        %v907 = vpop.permute.xlu0 %906
        %908 = vrot.lane.b32.xlu0 %v840, 32
        %v909 = vpop.permute.xlu0 %908
        %910 = vrot.lane.b32.xlu0 %v841, 32
        %v911 = vpop.permute.xlu0 %910
        %912 = vrot.lane.b32.xlu0 %v842, 32
        %v913 = vpop.permute.xlu0 %912
        %914 = vrot.lane.b32.xlu0 %v843, 32
        %v915 = vpop.permute.xlu0 %914
        %916 = vrot.lane.b32.xlu0 %v844, 32
        %v917 = vpop.permute.xlu0 %916
        %918 = vrot.lane.b32.xlu0 %v845, 32
        %v919 = vpop.permute.xlu0 %918
        %920 = vrot.lane.b32.xlu0 %v846, 32
        %v921 = vpop.permute.xlu0 %920
        %922 = vrot.lane.b32.xlu0 %v847, 32
        %v923 = vpop.permute.xlu0 %922
        %924 = vrot.lane.b32.xlu0 %v848, 32
        %v925 = vpop.permute.xlu0 %924
        %926 = vrot.lane.b32.xlu0 %v849, 32
        %v927 = vpop.permute.xlu0 %926
        %928 = vrot.lane.b32.xlu0 %v850, 32
        %v929 = vpop.permute.xlu0 %928
        %930 = vrot.lane.b32.xlu0 %v851, 32
        %v931 = vpop.permute.xlu0 %930
        %932 = vrot.lane.b32.xlu0 %v852, 32
        %v933 = vpop.permute.xlu0 %932
        %934 = vrot.lane.b32.xlu0 %v853, 32
        %v935 = vpop.permute.xlu0 %934
        %936 = vrot.lane.b32.xlu0 %v854, 32
        %v937 = vpop.permute.xlu0 %936
        %938 = vrot.lane.b32.xlu0 %v855, 32
        %v939 = vpop.permute.xlu0 %938
        %940 = vrot.lane.b32.xlu0 %v856, 32
        %v941 = vpop.permute.xlu0 %940
        %942 = vrot.lane.b32.xlu0 %v857, 32
        %v943 = vpop.permute.xlu0 %942
        %944 = vrot.lane.b32.xlu0 %v858, 32
        %v945 = vpop.permute.xlu0 %944
        %946 = vrot.lane.b32.xlu0 %v859, 32
        %v947 = vpop.permute.xlu0 %946
        %948 = vrot.lane.b32.xlu0 %v860, 32
        %v949 = vpop.permute.xlu0 %948
        %950 = vrot.lane.b32.xlu0 %v861, 32
        %v951 = vpop.permute.xlu0 %950
        %952 = vrot.lane.b32.xlu0 %v862, 32
        %v953 = vpop.permute.xlu0 %952
        %954 = vrot.lane.b32.xlu0 %v863, 32
        %v955 = vpop.permute.xlu0 %954
        %956 = vrot.lane.b32.xlu0 %v864, 32
        %v957 = vpop.permute.xlu0 %956
        %958 = vrot.lane.b32.xlu0 %v865, 32
        %v959 = vpop.permute.xlu0 %958
        %960 = vrot.lane.b32.xlu0 %v866, 32
        %v961 = vpop.permute.xlu0 %960
        %962 = vrot.lane.b32.xlu0 %v867, 32
        %v963 = vpop.permute.xlu0 %962
        %v996 = vmul.f32 %v773, %v901
        %v997 = vmul.f32 %v775, %v903
        %v998 = vmul.f32 %v777, %v905
        %v999 = vmul.f32 %v779, %v907
        %v1000 = vmul.f32 %v781, %v909
        %v1001 = vmul.f32 %v783, %v911
        %v1002 = vmul.f32 %v785, %v913
        %v1003 = vmul.f32 %v787, %v915
        %v1004 = vmul.f32 %v789, %v917
        %v1005 = vmul.f32 %v791, %v919
        %v1006 = vmul.f32 %v793, %v921
        %v1007 = vmul.f32 %v795, %v923
        %v1008 = vmul.f32 %v797, %v925
        %v1009 = vmul.f32 %v799, %v927
        %v1010 = vmul.f32 %v801, %v929
        %v1011 = vmul.f32 %v803, %v931
        %v1012 = vmul.f32 %v805, %v933
        %v1013 = vmul.f32 %v807, %v935
        %v1014 = vmul.f32 %v809, %v937
        %v1015 = vmul.f32 %v811, %v939
        %v1016 = vmul.f32 %v813, %v941
        %v1017 = vmul.f32 %v815, %v943
        %v1018 = vmul.f32 %v817, %v945
        %v1019 = vmul.f32 %v819, %v947
        %v1020 = vmul.f32 %v821, %v949
        %v1021 = vmul.f32 %v823, %v951
        %v1022 = vmul.f32 %v825, %v953
        %v1023 = vmul.f32 %v827, %v955
        %v1024 = vmul.f32 %v829, %v957
        %v1025 = vmul.f32 %v831, %v959
        %v1026 = vmul.f32 %v833, %v961
        %v1027 = vmul.f32 %v835, %v963
        %1029 = vset.pattern.permute.xlu0 32
        %1030 = vperm.xlu0 %1029, %v996
        %v1031 = vpop.permute.xlu0 %1030
        %1034 = vset.pattern.permute.xlu0 32
        %1035 = vperm.xlu0 %1034, %v997
        %v1036 = vpop.permute.xlu0 %1035
        %1039 = vset.pattern.permute.xlu0 32
        %1040 = vperm.xlu0 %1039, %v998
        %v1041 = vpop.permute.xlu0 %1040
        %1044 = vset.pattern.permute.xlu0 32
        %1045 = vperm.xlu0 %1044, %v999
        %v1046 = vpop.permute.xlu0 %1045
        %1049 = vset.pattern.permute.xlu0 32
        %1050 = vperm.xlu0 %1049, %v1000
        %v1051 = vpop.permute.xlu0 %1050
        %1054 = vset.pattern.permute.xlu0 32
        %1055 = vperm.xlu0 %1054, %v1001
        %v1056 = vpop.permute.xlu0 %1055
        %1059 = vset.pattern.permute.xlu0 32
        %1060 = vperm.xlu0 %1059, %v1002
        %v1061 = vpop.permute.xlu0 %1060
        %1064 = vset.pattern.permute.xlu0 32
        %1065 = vperm.xlu0 %1064, %v1003
        %v1066 = vpop.permute.xlu0 %1065
        %1069 = vset.pattern.permute.xlu0 32
        %1070 = vperm.xlu0 %1069, %v1004
        %v1071 = vpop.permute.xlu0 %1070
        %1074 = vset.pattern.permute.xlu0 32
        %1075 = vperm.xlu0 %1074, %v1005
        %v1076 = vpop.permute.xlu0 %1075
        %1079 = vset.pattern.permute.xlu0 32
        %1080 = vperm.xlu0 %1079, %v1006
        %v1081 = vpop.permute.xlu0 %1080
        %1084 = vset.pattern.permute.xlu0 32
        %1085 = vperm.xlu0 %1084, %v1007
        %v1086 = vpop.permute.xlu0 %1085
        %1089 = vset.pattern.permute.xlu0 32
        %1090 = vperm.xlu0 %1089, %v1008
        %v1091 = vpop.permute.xlu0 %1090
        %1094 = vset.pattern.permute.xlu0 32
        %1095 = vperm.xlu0 %1094, %v1009
        %v1096 = vpop.permute.xlu0 %1095
        %1099 = vset.pattern.permute.xlu0 32
        %1100 = vperm.xlu0 %1099, %v1010
        %v1101 = vpop.permute.xlu0 %1100
        %1104 = vset.pattern.permute.xlu0 32
        %1105 = vperm.xlu0 %1104, %v1011
        %v1106 = vpop.permute.xlu0 %1105
        %1109 = vset.pattern.permute.xlu0 32
        %1110 = vperm.xlu0 %1109, %v1012
        %v1111 = vpop.permute.xlu0 %1110
        %1114 = vset.pattern.permute.xlu0 32
        %1115 = vperm.xlu0 %1114, %v1013
        %v1116 = vpop.permute.xlu0 %1115
        %1119 = vset.pattern.permute.xlu0 32
        %1120 = vperm.xlu0 %1119, %v1014
        %v1121 = vpop.permute.xlu0 %1120
        %1124 = vset.pattern.permute.xlu0 32
        %1125 = vperm.xlu0 %1124, %v1015
        %v1126 = vpop.permute.xlu0 %1125
        %1129 = vset.pattern.permute.xlu0 32
        %1130 = vperm.xlu0 %1129, %v1016
        %v1131 = vpop.permute.xlu0 %1130
        %1134 = vset.pattern.permute.xlu0 32
        %1135 = vperm.xlu0 %1134, %v1017
        %v1136 = vpop.permute.xlu0 %1135
        %1139 = vset.pattern.permute.xlu0 32
        %1140 = vperm.xlu0 %1139, %v1018
        %v1141 = vpop.permute.xlu0 %1140
        %1144 = vset.pattern.permute.xlu0 32
        %1145 = vperm.xlu0 %1144, %v1019
        %v1146 = vpop.permute.xlu0 %1145
        %1149 = vset.pattern.permute.xlu0 32
        %1150 = vperm.xlu0 %1149, %v1020
        %v1151 = vpop.permute.xlu0 %1150
        %1154 = vset.pattern.permute.xlu0 32
        %1155 = vperm.xlu0 %1154, %v1021
        %v1156 = vpop.permute.xlu0 %1155
        %1159 = vset.pattern.permute.xlu0 32
        %1160 = vperm.xlu0 %1159, %v1022
        %v1161 = vpop.permute.xlu0 %1160
        %1164 = vset.pattern.permute.xlu0 32
        %1165 = vperm.xlu0 %1164, %v1023
        %v1166 = vpop.permute.xlu0 %1165
        %1169 = vset.pattern.permute.xlu0 32
        %1170 = vperm.xlu0 %1169, %v1024
        %v1171 = vpop.permute.xlu0 %1170
        %1174 = vset.pattern.permute.xlu0 32
        %1175 = vperm.xlu0 %1174, %v1025
        %v1176 = vpop.permute.xlu0 %1175
        %1179 = vset.pattern.permute.xlu0 32
        %1180 = vperm.xlu0 %1179, %v1026
        %v1181 = vpop.permute.xlu0 %1180
        %1184 = vset.pattern.permute.xlu0 32
        %1185 = vperm.xlu0 %1184, %v1027
        %v1186 = vpop.permute.xlu0 %1185
        %v1188 = vmul.f32 %v518, %v1031
        %v1189 = vmul.f32 %v521, %v1036
        %v1190 = vmul.f32 %v526, %v1041
        %v1191 = vmul.f32 %v529, %v1046
        %v1192 = vmul.f32 %v534, %v1051
        %v1193 = vmul.f32 %v537, %v1056
        %v1194 = vmul.f32 %v542, %v1061
        %v1195 = vmul.f32 %v545, %v1066
        %v1196 = vmul.f32 %v550, %v1071
        %v1197 = vmul.f32 %v553, %v1076
        %v1198 = vmul.f32 %v558, %v1081
        %v1199 = vmul.f32 %v561, %v1086
        %v1200 = vmul.f32 %v566, %v1091
        %v1201 = vmul.f32 %v569, %v1096
        %v1202 = vmul.f32 %v574, %v1101
        %v1203 = vmul.f32 %v577, %v1106
        %v1204 = vmul.f32 %v582, %v1111
        %v1205 = vmul.f32 %v585, %v1116
        %v1206 = vmul.f32 %v590, %v1121
        %v1207 = vmul.f32 %v593, %v1126
        %v1208 = vmul.f32 %v598, %v1131
        %v1209 = vmul.f32 %v601, %v1136
        %v1210 = vmul.f32 %v606, %v1141
        %v1211 = vmul.f32 %v609, %v1146
        %v1212 = vmul.f32 %v614, %v1151
        %v1213 = vmul.f32 %v617, %v1156
        %v1214 = vmul.f32 %v622, %v1161
        %v1215 = vmul.f32 %v625, %v1166
        %v1216 = vmul.f32 %v630, %v1171
        %v1217 = vmul.f32 %v633, %v1176
        %v1218 = vmul.f32 %v638, %v1181
        %v1219 = vmul.f32 %v641, %v1186
        %v1220 = vlaneseq
        %v1221 = vshrl.u32 %v1220, 7
        %s1222 = smul.u32 %s29, 8
        %v1223 = vstv %s1222
        %v1224 = vadd.s32 %v1221, %v1223
        %v1225 = vld [vmem:[%s264] sm:$0x3]
        %v1226 = vlaneseq
        %v1227 = vshrl.u32 %v1226, 7
        %v1228 = vsub.s32 0, %v1227
        %v1229 = vrot.slane %v1225, %v1228
        %v1230 = vlaneseq
        %v1231 = vshrl.u32 %v1230, 7
        %v1232 = vsub.s32 1, %v1231
        %v1233 = vrot.slane %v1225, %v1232
        %vm1234 = vcmp.eq.s32.totalorder %v1224, %v1229
        %vm1235 = vcmp.eq.s32.totalorder %v1224, %v1233
        %v1236 = vsel %vm1234, 1, 0
        %v1237 = vsel %vm1235, 1, 0
        %v1238 = vcvt.s32.f32 %v1236
        %v1239 = vcvt.s32.f32 %v1237
        %v1240 = vpack.c.bf16 %v1238, %v1238
        %v1241 = vpack.c.bf16 %v1239, %v1239
        %v1242 = vld [vmem:[%s260] sm:$0xff]
        %v1243 = vpack.c.bf16 %v1189, %v1188
        %v1244 = vpack.c.bf16 %v1191, %v1190
        %v1245 = vpack.c.bf16 %v1193, %v1192
        %v1246 = vpack.c.bf16 %v1195, %v1194
        %v1247 = vpack.c.bf16 %v1197, %v1196
        %v1248 = vpack.c.bf16 %v1199, %v1198
        %v1249 = vpack.c.bf16 %v1201, %v1200
        %v1250 = vpack.c.bf16 %v1203, %v1202
        %v1251 = vpack.c.bf16 %v1205, %v1204
        %v1252 = vpack.c.bf16 %v1207, %v1206
        %v1253 = vpack.c.bf16 %v1209, %v1208
        %v1254 = vpack.c.bf16 %v1211, %v1210
        %v1255 = vpack.c.bf16 %v1213, %v1212
        %v1256 = vpack.c.bf16 %v1215, %v1214
        %v1257 = vpack.c.bf16 %v1217, %v1216
        %v1258 = vpack.c.bf16 %v1219, %v1218
        %1259 = vmatprep.subr.bf16.mxu0 0
        %1260 = vmatpush1.bf16.msra.mxu0 %v1243
        %1261 = vmatprep.subr.bf16.mxu0 0
        %1262 = vmatpush1.bf16.msra.mxu0 %v1244
        %1263 = vmatprep.subr.bf16.mxu0 0
        %1264 = vmatpush1.bf16.msra.mxu0 %v1245
        %1265 = vmatprep.subr.bf16.mxu0 0
        %1266 = vmatpush1.bf16.msra.mxu0 %v1246
        %1267 = vmatprep.subr.bf16.mxu0 0
        %1268 = vmatpush1.bf16.msra.mxu0 %v1247
        %1269 = vmatprep.subr.bf16.mxu0 0
        %1270 = vmatpush1.bf16.msra.mxu0 %v1248
        %1271 = vmatprep.subr.bf16.mxu0 0
        %1272 = vmatpush1.bf16.msra.mxu0 %v1249
        %1273 = vmatprep.subr.bf16.mxu0 0
        %1274 = vmatpush1.bf16.msra.mxu0 %v1250
        %1275 = vmatprep.subr.bf16.mxu0 0
        %1276 = vmatpush1.bf16.msra.mxu0 %v1251
        %1277 = vmatprep.subr.bf16.mxu0 0
        %1278 = vmatpush1.bf16.msra.mxu0 %v1252
        %1279 = vmatprep.subr.bf16.mxu0 0
        %1280 = vmatpush1.bf16.msra.mxu0 %v1253
        %1281 = vmatprep.subr.bf16.mxu0 0
        %1282 = vmatpush1.bf16.msra.mxu0 %v1254
        %1283 = vmatprep.subr.bf16.mxu0 0
        %1284 = vmatpush1.bf16.msra.mxu0 %v1255
        %1285 = vmatprep.subr.bf16.mxu0 0
        %1286 = vmatpush1.bf16.msra.mxu0 %v1256
        %1287 = vmatprep.subr.bf16.mxu0 0
        %1288 = vmatpush1.bf16.msra.mxu0 %v1257
        %1289 = vmatprep.subr.bf16.mxu0 0
        %1290 = vmatpush1.bf16.msra.mxu0 %v1258
        %1291 = vmatprep.mubr.bf16.mxu0 %v1241
        %1292 = vmatmul.mubr.bf16.gmra.mrb[0].mxu0 %v1240
        %v1293 = vpop.f32.mrb[0].mxu0
        %v1294 = vadd.f32 0.0, %v1293
        %v1295 = vpop.f32.mrb[0].mxu0
        %v1296 = vpop.f32.mrb[0].mxu0
        %v1297 = vpop.f32.mrb[0].mxu0
        %1298 = vdwg.mxu0
        %v1299 = vadd.f32 %v1242, %v1294
        %1300 = vst [vmem:[%s260] sm:$0xff] %v1299
        %p1301 = scmp.eq.s32.totalorder %s30, 3
        // Predicated region
        $region41: #{tpu_custom_call.1} parent=35 // pred_check
          %p1302 = pneg %p1301
        $region42: #{tpu_custom_call.1} parent=35 // pred_check_branch
          %1304 = sbr.rel (%p1302) target = $region44
        $region43: #{tpu_custom_call.1} parent=35 // pred_region
          %v1305 = vld [vmem:[%s260] sm:$0xff]
          %v1306 = vmax.f32 %v1305, 0.0
          %1307 = vst [vmem:[%s260] sm:$0xff] %v1306
        $region44: #{tpu_custom_call.1} parent=35 // pred_fallthru
          _
        %s1308 = sand.u32 %s151, 1
        %s1309 = scalar_lea.sflag [#allocation5], %s1308
        %s1310 = sand.u32 %s151, 1
        %s1311 = smul.addr %s1310, 8
        %s1312 = scalar_lea.vmem [#allocation4], %s1311
        // Predicated region
        $region45: #{tpu_custom_call.1} parent=35 // pred_check
          %p1313 = pneg %p161
        $region46: #{tpu_custom_call.1} parent=35 // pred_check_branch
          %1315 = sbr.rel (%p1313) target = $region48
        $region47: #{tpu_custom_call.1} parent=35 // pred_region
          %s1317 = ssub.s32 128, 128
          %1318 = vsyncadd %s1309, %s1317
          %s1319 = smul.addr %s29, 128
          %s1320 = scalar_lea.hbm %s5, %s1319
          %s1322 = sshll.u32 %s1312, 4
          %s1323 = int_to_ptr.vmem [resolvable:$true] %s1322
          %1325 = dma.vmem_to_hbm [thread:$0]  %s1323, 128, %s1320, %s1309
        $region48: #{tpu_custom_call.1} parent=35 // pred_fallthru
          _
      $region36: #{tpu_custom_call.1} parent=5 // pred_fallthru
        _
      %p1326 = scmp.le.s32.totalorder 2, %s20
      // Predicated region
      $region49: #{tpu_custom_call.1} parent=5 // pred_check
        %p1327 = pneg %p1326
      $region50: #{tpu_custom_call.1} parent=5 // pred_check_branch
        %1329 = sbr.rel (%p1327) target = $region52
      $region51: #{tpu_custom_call.1} parent=5 // pred_region
        %s1330 = ssub.s32 %s20, 2
        // Predicated region
        $region53: #{tpu_custom_call.1} parent=51 // pred_check
          %p1331 = pneg %p167
        $region54: #{tpu_custom_call.1} parent=51 // pred_check_branch
          %1333 = sbr.rel (%p1331) target = $region56
        $region55: #{tpu_custom_call.1} parent=51 // pred_region
          %s1334 = sand.u32 %s152, 1
          %s1335 = scalar_lea.sflag [#allocation5], %s1334
          %s1336 = sand.u32 %s152, 1
          %s1337 = smul.addr %s1336, 8
          %s1338 = scalar_lea.vmem [#allocation4], %s1337
          %1339 = dma.done %s1335, 128
        $region56: #{tpu_custom_call.1} parent=51 // pred_fallthru
          _
      $region52: #{tpu_custom_call.1} parent=5 // pred_fallthru
        _
    $region6: #{tpu_custom_call.1} parent=1 // loop_footer
      %s24 = sadd.s32 1, %s20
    $region7: #{tpu_custom_call.1} parent=1 // loop_footer_branch
      %19 = sbr.rel target = $region3
    $region8: #{tpu_custom_call.1} parent=1 // loop_exit
      _
    %1340 = vsyncpa [#allocation5], 1
    %s1341 = scalar_lea.sflag [#allocation5], 1
    %1342 = vsyncpa %s1341, 1

</llo_original>
